<compile_context>
chip_gen: v7x
topology: tpu7x:2x2x1
jax: 0.10.0
libtpu: 0.0.40
codegen_flags: <defaults>
</compile_context>

<pallas_src>
import jax
import jax.numpy as jnp
from jax.experimental import pallas as pl
from jax.experimental.pallas import tpu as pltpu


def embedding_kernel(x_ref, w1t_ref, b1_ref, w23t_ref, b23_ref, o_ref):
    # x_ref:   (TM, L)   tile of the input rows
    # w1t_ref: (L,  E)   fc1 weight, pre-transposed (resident across grid)
    # b1_ref:  (1,  E)
    # w23t_ref:(E,  L)   (W2 + W3).T, pre-fused + pre-transposed (resident)
    # b23_ref: (1,  L)   b2 + b3
    # o_ref:   (TM, L)
    x = x_ref[...]
    # fc1: (TM, L) @ (L, E) -> (TM, E), f32 accumulation on the MXU
    h = jnp.dot(x, w1t_ref[...], preferred_element_type=jnp.float32) + b1_ref[...]
    # fused fc2+fc3: (TM, E) @ (E, L) -> (TM, L)
    out = jnp.dot(h.astype(w23t_ref.dtype), w23t_ref[...],
                  preferred_element_type=jnp.float32) + b23_ref[...]
    o_ref[...] = out.astype(o_ref.dtype)


def embedding_forward(x, w1, b1, w2, b2, w3, b3, *, tm=256):
    """out = (x @ w1.T + b1) @ (w2 + w3).T + (b2 + b3), via one Pallas call.

    Weights are PyTorch-layout (out_features, in_features); fusion and
    transposition happen once here (tiny XLA ops), not inside the kernel.
    """
    N, L = x.shape
    E = w1.shape[0]

    # Algebraic fusion of fc2 and fc3 (exact) + pre-transpose so the kernel
    # needs no in-kernel `.T`.
    w1t = w1.T                         # (L, E)
    w23t = (w2 + w3).T                 # (E, L)
    b1_2d = b1.reshape(1, E)
    b23_2d = (b2 + b3).reshape(1, L)

    # Tile the batch dim; weights stay resident (constant index_map).
    tm = min(tm, N)
    grid = (pl.cdiv(N, tm),)

    itemsize = jnp.dtype(x.dtype).itemsize
    cost = pl.CostEstimate(
        flops=2 * N * L * E + 2 * N * E * L,
        transcendentals=0,
        bytes_accessed=itemsize * (N * L            # x
                                   + L * E + E      # w1t, b1
                                   + E * L + L      # w23t, b23
                                   + N * L),        # out
    )

    return pl.pallas_call(
        embedding_kernel,
        out_shape=jax.ShapeDtypeStruct((N, L), x.dtype),
        grid=grid,
        in_specs=[
            pl.BlockSpec((tm, L), lambda i: (i, 0)),   # x tile
            pl.BlockSpec((L, E), lambda i: (0, 0)),    # W1.T (resident)
            pl.BlockSpec((1, E), lambda i: (0, 0)),    # b1   (resident)
            pl.BlockSpec((E, L), lambda i: (0, 0)),    # (W2+W3).T (resident)
            pl.BlockSpec((1, L), lambda i: (0, 0)),    # b2+b3 (resident)
        ],
        out_specs=pl.BlockSpec((tm, L), lambda i: (i, 0)),
        compiler_params=pltpu.CompilerParams(
            dimension_semantics=("parallel",),
        ),
        cost_estimate=cost,
    )(x, w1t, b1_2d, w23t, b23_2d)


def init_linear(key, out_features, in_features, dtype=jnp.float32):
    # Deterministic PyTorch-style init: U(-1/sqrt(fan_in), 1/sqrt(fan_in))
    kw, kb = jax.random.split(key)
    bound = 1.0 / (in_features ** 0.5)
    w = jax.random.uniform(kw, (out_features, in_features), dtype, -bound, bound)
    b = jax.random.uniform(kb, (out_features,), dtype, -bound, bound)
    return w, b


def reference_forward(x, w1, b1, w2, b2, w3, b3):
    h = x @ w1.T + b1
    return (h @ w2.T + b2) + (h @ w3.T + b3)


if __name__ == "__main__":
    # Small shapes consistent with the module: input_size = max_length,
    # hidden = embedding_dim.  forward() is called on 2-D (rows, max_length).
    N = 8            # batch of "token rows"
    L = 16           # max_length (input_size)
    E = 32           # embedding_dim

    key = jax.random.PRNGKey(0)
    kx, k1, k2, k3 = jax.random.split(key, 4)

    x = jax.random.normal(kx, (N, L), dtype=jnp.float32)
    w1, b1 = init_linear(k1, E, L)   # fc1: Linear(L, E)
    w2, b2 = init_linear(k2, L, E)   # fc2: Linear(E, L)
    w3, b3 = init_linear(k3, L, E)   # fc3: Linear(E, L)

    out = embedding_forward(x, w1, b1, w2, b2, w3, b3)
    out = jax.block_until_ready(out)

    ref = reference_forward(x, w1, b1, w2, b2, w3, b3)
    assert out.shape == (N, L)
    assert jnp.allclose(out, ref, atol=1e-5, rtol=1e-5), "mismatch vs reference"

    print("KERNEL_OK")
</pallas_src>

<mosaic_0001>
module attributes {stable_mosaic.version = 11 : i64} {
  func.func @embedding_kernel(%arg0: i32, %arg1: memref<8x16xf32, #tpu.memory_space<vmem>>, %arg2: memref<16x32xf32, #tpu.memory_space<vmem>>, %arg3: memref<1x32xf32, #tpu.memory_space<vmem>>, %arg4: memref<32x16xf32, #tpu.memory_space<vmem>>, %arg5: memref<1x16xf32, #tpu.memory_space<vmem>>, %arg6: memref<8x16xf32, #tpu.memory_space<vmem>>) attributes {dimension_semantics = [#tpu.dimension_semantics<parallel>], iteration_bounds = array<i64: 1>, scalar_prefetch = 0 : i64, scratch_operands = 0 : i64, tpu.core_type = #tpu.core_type<tc>, window_params = [{transform_indices = @transform_0, window_bounds = array<i64: 8, 16>}, {pipeline_mode = #tpu.pipeline_mode<synchronous>, transform_indices = @transform_1, window_bounds = array<i64: 16, 32>}, {pipeline_mode = #tpu.pipeline_mode<synchronous>, transform_indices = @transform_2, window_bounds = array<i64: 1, 32>}, {pipeline_mode = #tpu.pipeline_mode<synchronous>, transform_indices = @transform_3, window_bounds = array<i64: 32, 16>}, {pipeline_mode = #tpu.pipeline_mode<synchronous>, transform_indices = @transform_4, window_bounds = array<i64: 1, 16>}, {transform_indices = @transform_5, window_bounds = array<i64: 8, 16>}]} {
    %c0 = arith.constant 0 : index
    %c0_0 = arith.constant 0 : index
    %0 = vector.load %arg1[%c0, %c0_0] : memref<8x16xf32, #tpu.memory_space<vmem>>, vector<8x16xf32>
    %c0_1 = arith.constant 0 : index
    %c0_2 = arith.constant 0 : index
    %1 = vector.load %arg2[%c0_1, %c0_2] : memref<16x32xf32, #tpu.memory_space<vmem>>, vector<16x32xf32>
    %cst = arith.constant dense<0.000000e+00> : vector<8x32xf32>
    %2 = tpu.matmul %0, %1, %cst {dimension_numbers = #tpu.dot_dimension_numbers<[1], [0], [0], [1], [0, 0, 1, 1], [], []>} : vector<8x16xf32>, vector<16x32xf32>, vector<8x32xf32> -> vector<8x32xf32>
    %c0_3 = arith.constant 0 : index
    %c0_4 = arith.constant 0 : index
    %3 = vector.load %arg3[%c0_3, %c0_4] : memref<1x32xf32, #tpu.memory_space<vmem>>, vector<1x32xf32>
    %4 = vector.broadcast %3 : vector<1x32xf32> to vector<8x32xf32>
    %5 = arith.addf %2, %4 : vector<8x32xf32>
    %c0_5 = arith.constant 0 : index
    %c0_6 = arith.constant 0 : index
    %6 = vector.load %arg4[%c0_5, %c0_6] : memref<32x16xf32, #tpu.memory_space<vmem>>, vector<32x16xf32>
    %cst_7 = arith.constant dense<0.000000e+00> : vector<8x16xf32>
    %7 = tpu.matmul %5, %6, %cst_7 {dimension_numbers = #tpu.dot_dimension_numbers<[1], [0], [0], [1], [0, 0, 1, 1], [], []>} : vector<8x32xf32>, vector<32x16xf32>, vector<8x16xf32> -> vector<8x16xf32>
    %c0_8 = arith.constant 0 : index
    %c0_9 = arith.constant 0 : index
    %8 = vector.load %arg5[%c0_8, %c0_9] : memref<1x16xf32, #tpu.memory_space<vmem>>, vector<1x16xf32>
    %9 = vector.broadcast %8 : vector<1x16xf32> to vector<8x16xf32>
    %10 = arith.addf %7, %9 : vector<8x16xf32>
    %c0_10 = arith.constant 0 : index
    %c0_11 = arith.constant 0 : index
    %11 = vector.load %arg6[%c0_10, %c0_11] : memref<8x16xf32, #tpu.memory_space<vmem>>, vector<8x16xf32>
    tpu.vector_store %arg6[%c0_10, %c0_11], %10 {strides = array<i32>} : memref<8x16xf32, #tpu.memory_space<vmem>>, vector<8x16xf32>,
    return
  }
  func.func @transform_0(%arg0: i32) -> (i32, i32) {
    %c0_i32 = arith.constant 0 : i32
    %c0_i32_0 = arith.constant 0 : i32
    return %arg0, %c0_i32 : i32, i32
  }
  func.func @transform_1(%arg0: i32) -> (i32, i32) {
    %c0_i32 = arith.constant 0 : i32
    %c0_i32_0 = arith.constant 0 : i32
    %c0_i32_1 = arith.constant 0 : i32
    return %c0_i32, %c0_i32_0 : i32, i32
  }
  func.func @transform_2(%arg0: i32) -> (i32, i32) {
    %c0_i32 = arith.constant 0 : i32
    %c0_i32_0 = arith.constant 0 : i32
    %c0_i32_1 = arith.constant 0 : i32
    return %c0_i32, %c0_i32_0 : i32, i32
  }
  func.func @transform_3(%arg0: i32) -> (i32, i32) {
    %c0_i32 = arith.constant 0 : i32
    %c0_i32_0 = arith.constant 0 : i32
    %c0_i32_1 = arith.constant 0 : i32
    return %c0_i32, %c0_i32_0 : i32, i32
  }
  func.func @transform_4(%arg0: i32) -> (i32, i32) {
    %c0_i32 = arith.constant 0 : i32
    %c0_i32_0 = arith.constant 0 : i32
    %c0_i32_1 = arith.constant 0 : i32
    return %c0_i32, %c0_i32_0 : i32, i32
  }
  func.func @transform_5(%arg0: i32) -> (i32, i32) {
    %c0_i32 = arith.constant 0 : i32
    %c0_i32_0 = arith.constant 0 : i32
    return %arg0, %c0_i32 : i32, i32
  }
}

</mosaic_0001>

<llo_original>
// kernel: tpu_custom_call.1
$region0: #{tpu_custom_call.1}
  #allocation0 [shape = 'u32[]', space=smem, size = 0x4, offset = 0x4, fixed_abs, tag = 'smem constant byte address 0x4 - core index']
  #allocation1 [shape = 'u32[144,128]{1,0:T(1,128)}', space=vmem, size = 0x12000, scoped, tag = 'internal scratch']
  %s0 = inlined_call_operand.vmem [shape: f32[8,16], index: 0, kind: input, shape index: {}]
  %s1 = inlined_call_operand.vmem [shape: f32[16,32], index: 1, kind: input, shape index: {}]
  %s2 = inlined_call_operand.vmem [shape: f32[1,32], index: 2, kind: input, shape index: {}]
  %s3 = inlined_call_operand.vmem [shape: f32[32,16], index: 3, kind: input, shape index: {}]
  %s4 = inlined_call_operand.vmem [shape: f32[1,16], index: 4, kind: input, shape index: {}]
  %s5 = inlined_call_operand.hbm [shape: f32[8,16], index: 5, kind: output, shape index: {}]
  %s6 = sld [smem:[#allocation0]]
  $region30: #{tpu_custom_call.1} parent=0
    _
  %s8 = ssub.s32 1, %s6
  %s9 = scalar_select 0, %s8, %s6
  $region1: #{tpu_custom_call.1} parent=0
    #allocation2 [shape = 'u8[4096]{0}', space=vmem, size = 0x1000, scoped, tag = 'output window, operand 0, single buffered']
    #allocation3 [shape = 's32[1]{0}', space=sflag, size = 0x4, scoped, tag = 'scoped memory for tpu_custom_call.1']
    %10 = vsyncpa [#allocation3], 0
    // Predicated region
    $region2: #{tpu_custom_call.1} parent=1 // pred_check
      _
    $region3: #{tpu_custom_call.1} parent=1 // pred_check_branch
      %12 = sbr.rel (0) target = $region5
    $region4: #{tpu_custom_call.1} parent=1 // pred_region
      _
    $region5: #{tpu_custom_call.1} parent=1 // pred_fallthru
      _
    // Predicated region
    $region6: #{tpu_custom_call.1} parent=1 // pred_check
      _
    $region7: #{tpu_custom_call.1} parent=1 // pred_check_branch
      %14 = sbr.rel (0) target = $region9
    $region8: #{tpu_custom_call.1} parent=1 // pred_region
      _
    $region9: #{tpu_custom_call.1} parent=1 // pred_fallthru
      _
    // Predicated region
    $region10: #{tpu_custom_call.1} parent=1 // pred_check
      _
    $region11: #{tpu_custom_call.1} parent=1 // pred_check_branch
      %16 = sbr.rel (0) target = $region13
    $region12: #{tpu_custom_call.1} parent=1 // pred_region
      _
    $region13: #{tpu_custom_call.1} parent=1 // pred_fallthru
      _
    // Predicated region
    $region14: #{tpu_custom_call.1} parent=1 // pred_check
      _
    $region15: #{tpu_custom_call.1} parent=1 // pred_check_branch
      %18 = sbr.rel (0) target = $region17
    $region16: #{tpu_custom_call.1} parent=1 // pred_region
      _
    $region17: #{tpu_custom_call.1} parent=1 // pred_fallthru
      _
    // Predicated region
    $region18: #{tpu_custom_call.1} parent=1 // pred_check
      _
    $region19: #{tpu_custom_call.1} parent=1 // pred_check_branch
      %20 = sbr.rel (0) target = $region21
    $region20: #{tpu_custom_call.1} parent=1 // pred_region
      _
    $region21: #{tpu_custom_call.1} parent=1 // pred_fallthru
      _
    %v21 = vld [vmem:[%s0] sm:$0xff]
    %v22 = vld [vmem:[%s1] sm:$0xff]
    %v23 = vld [vmem:[%s1 + $0x8] sm:$0xff]
    %v24 = vld [vmem:[%s2] sm:$0x1]
    %v26 = vlaneseq
    %v27 = vshrl.u32 %v26, 7
    %v28 = vsub.s32 0, %v27
    %v29 = vrot.slane %v24, %v28
    %vm31 = vcmask 130048
    %v33 = vsel %vm31, %v21, 0
    %35 = vmatprep.subr.mxu0 0.0
    %36 = vmatpush1.msra.mxu0 %v22
    %37 = vmatprep.subr.mxu0 0.0
    %38 = vmatpush1.msra.mxu0 %v23
    %39 = vmatprep.subr.mxu0 0.0
    %40 = vmatpush1.msra.mxu0 0.0
    %41 = vmatprep.subr.mxu0 0.0
    %42 = vmatpush1.msra.mxu0 0.0
    %43 = vmatprep.subr.mxu0 0.0
    %44 = vmatpush1.msra.mxu0 0.0
    %45 = vmatprep.subr.mxu0 0.0
    %46 = vmatpush1.msra.mxu0 0.0
    %47 = vmatprep.subr.mxu0 0.0
    %48 = vmatpush1.msra.mxu0 0.0
    %49 = vmatprep.subr.mxu0 0.0
    %50 = vmatpush1.msra.mxu0 0.0
    %51 = vmatprep.subr.mxu0 0.0
    %52 = vmatpush1.msra.mxu0 0.0
    %53 = vmatprep.subr.mxu0 0.0
    %54 = vmatpush1.msra.mxu0 0.0
    %55 = vmatprep.subr.mxu0 0.0
    %56 = vmatpush1.msra.mxu0 0.0
    %57 = vmatprep.subr.mxu0 0.0
    %58 = vmatpush1.msra.mxu0 0.0
    %59 = vmatprep.subr.mxu0 0.0
    %60 = vmatpush1.msra.mxu0 0.0
    %61 = vmatprep.subr.mxu0 0.0
    %62 = vmatpush1.msra.mxu0 0.0
    %63 = vmatprep.subr.mxu0 0.0
    %64 = vmatpush1.msra.mxu0 0.0
    %65 = vmatprep.subr.mxu0 0.0
    %66 = vmatpush1.msra.mxu0 0.0
    %67 = vmatprep.subr.mxu0 0.0
    %68 = vmatpush1.msra.mxu0 0.0
    %69 = vmatprep.subr.mxu0 0.0
    %70 = vmatpush1.msra.mxu0 0.0
    %71 = vmatprep.subr.mxu0 0.0
    %72 = vmatpush1.msra.mxu0 0.0
    %73 = vmatprep.subr.mxu0 0.0
    %74 = vmatpush1.msra.mxu0 0.0
    %75 = vmatprep.subr.mxu0 0.0
    %76 = vmatpush1.msra.mxu0 0.0
    %77 = vmatprep.subr.mxu0 0.0
    %78 = vmatpush1.msra.mxu0 0.0
    %79 = vmatprep.subr.mxu0 0.0
    %80 = vmatpush1.msra.mxu0 0.0
    %81 = vmatprep.subr.mxu0 0.0
    %82 = vmatpush1.msra.mxu0 0.0
    %83 = vmatprep.subr.mxu0 0.0
    %84 = vmatpush1.msra.mxu0 0.0
    %85 = vmatprep.subr.mxu0 0.0
    %86 = vmatpush1.msra.mxu0 0.0
    %87 = vmatprep.subr.mxu0 0.0
    %88 = vmatpush1.msra.mxu0 0.0
    %89 = vmatprep.subr.mxu0 0.0
    %90 = vmatpush1.msra.mxu0 0.0
    %91 = vmatprep.subr.mxu0 0.0
    %92 = vmatpush1.msra.mxu0 0.0
    %93 = vmatprep.subr.mxu0 0.0
    %94 = vmatpush1.msra.mxu0 0.0
    %95 = vmatprep.subr.mxu0 0.0
    %96 = vmatpush1.msra.mxu0 0.0
    %97 = vmatprep.subr.mxu0 0.0
    %98 = vmatpush1.msra.mxu0 0.0
    %99 = vmatprep.mubr.f32.mxu0 0.0
    %100 = vmatmul.mubr.f32.gmra.mrb[0].mxu0 %v33
    %v101 = vpop.f32.mrb[0].mxu0
    %v102 = vadd.f32 %v29, %v101
    %v103 = vpop.f32.mrb[0].mxu0
    %104 = vdwg.mxu0
    %v105 = vld [vmem:[%s3] sm:$0xff]
    %v106 = vld [vmem:[%s3 + $0x8] sm:$0xff]
    %v107 = vld [vmem:[%s3 + $0x10] sm:$0xff]
    %v108 = vld [vmem:[%s3 + $0x18] sm:$0xff]
    %v109 = vld [vmem:[%s4] sm:$0x1]
    %v111 = vlaneseq
    %v112 = vshrl.u32 %v111, 7
    %v113 = vsub.s32 0, %v112
    %v114 = vrot.slane %v109, %v113
    %vm116 = vcmask 261120
    %v118 = vsel %vm116, %v102, 0
    %120 = vmatprep.subr.mxu0 0.0
    %121 = vmatpush1.msra.mxu0 %v105
    %122 = vmatprep.subr.mxu0 0.0
    %123 = vmatpush1.msra.mxu0 %v106
    %124 = vmatprep.subr.mxu0 0.0
    %125 = vmatpush1.msra.mxu0 %v107
    %126 = vmatprep.subr.mxu0 0.0
    %127 = vmatpush1.msra.mxu0 %v108
    %128 = vmatprep.subr.mxu0 0.0
    %129 = vmatpush1.msra.mxu0 0.0
    %130 = vmatprep.subr.mxu0 0.0
    %131 = vmatpush1.msra.mxu0 0.0
    %132 = vmatprep.subr.mxu0 0.0
    %133 = vmatpush1.msra.mxu0 0.0
    %134 = vmatprep.subr.mxu0 0.0
    %135 = vmatpush1.msra.mxu0 0.0
    %136 = vmatprep.subr.mxu0 0.0
    %137 = vmatpush1.msra.mxu0 0.0
    %138 = vmatprep.subr.mxu0 0.0
    %139 = vmatpush1.msra.mxu0 0.0
    %140 = vmatprep.subr.mxu0 0.0
    %141 = vmatpush1.msra.mxu0 0.0
    %142 = vmatprep.subr.mxu0 0.0
    %143 = vmatpush1.msra.mxu0 0.0
    %144 = vmatprep.subr.mxu0 0.0
    %145 = vmatpush1.msra.mxu0 0.0
    %146 = vmatprep.subr.mxu0 0.0
    %147 = vmatpush1.msra.mxu0 0.0
    %148 = vmatprep.subr.mxu0 0.0
    %149 = vmatpush1.msra.mxu0 0.0
    %150 = vmatprep.subr.mxu0 0.0
    %151 = vmatpush1.msra.mxu0 0.0
    %152 = vmatprep.subr.mxu0 0.0
    %153 = vmatpush1.msra.mxu0 0.0
    %154 = vmatprep.subr.mxu0 0.0
    %155 = vmatpush1.msra.mxu0 0.0
    %156 = vmatprep.subr.mxu0 0.0
    %157 = vmatpush1.msra.mxu0 0.0
    %158 = vmatprep.subr.mxu0 0.0
    %159 = vmatpush1.msra.mxu0 0.0
    %160 = vmatprep.subr.mxu0 0.0
    %161 = vmatpush1.msra.mxu0 0.0
    %162 = vmatprep.subr.mxu0 0.0
    %163 = vmatpush1.msra.mxu0 0.0
    %164 = vmatprep.subr.mxu0 0.0
    %165 = vmatpush1.msra.mxu0 0.0
    %166 = vmatprep.subr.mxu0 0.0
    %167 = vmatpush1.msra.mxu0 0.0
    %168 = vmatprep.subr.mxu0 0.0
    %169 = vmatpush1.msra.mxu0 0.0
    %170 = vmatprep.subr.mxu0 0.0
    %171 = vmatpush1.msra.mxu0 0.0
    %172 = vmatprep.subr.mxu0 0.0
    %173 = vmatpush1.msra.mxu0 0.0
    %174 = vmatprep.subr.mxu0 0.0
    %175 = vmatpush1.msra.mxu0 0.0
    %176 = vmatprep.subr.mxu0 0.0
    %177 = vmatpush1.msra.mxu0 0.0
    %178 = vmatprep.subr.mxu0 0.0
    %179 = vmatpush1.msra.mxu0 0.0
    %180 = vmatprep.subr.mxu0 0.0
    %181 = vmatpush1.msra.mxu0 0.0
    %182 = vmatprep.subr.mxu0 0.0
    %183 = vmatpush1.msra.mxu0 0.0
    %184 = vmatprep.mubr.f32.mxu0 0.0
    %185 = vmatmul.mubr.f32.gmra.mrb[0].mxu0 %v118
    %v186 = vpop.f32.mrb[0].mxu0
    %v187 = vadd.f32 %v114, %v186
    %v188 = vpop.f32.mrb[0].mxu0
    %189 = vdwg.mxu0
    %190 = vst.msk [vmem:[#allocation2] sm:$0xff] %vm31, %v187
    // Predicated region
    $region22: #{tpu_custom_call.1} parent=1 // pred_check
      _
    $region23: #{tpu_custom_call.1} parent=1 // pred_check_branch
      %192 = sbr.rel (0) target = $region25
    $region24: #{tpu_custom_call.1} parent=1 // pred_region
      %s194 = ssub.s32 128, 128
      %195 = vsyncadd [#allocation3], %s194
      %s197 = sshll.u32 [#allocation2], 4
      %s198 = int_to_ptr.vmem [resolvable:$true] %s197
      %200 = dma.vmem_to_hbm [thread:$0]  %s198, 128, %s5, [#allocation3]
    $region25: #{tpu_custom_call.1} parent=1 // pred_fallthru
      _
    // Predicated region
    $region26: #{tpu_custom_call.1} parent=1 // pred_check
      _
    $region27: #{tpu_custom_call.1} parent=1 // pred_check_branch
      %202 = sbr.rel (0) target = $region29
    $region28: #{tpu_custom_call.1} parent=1 // pred_region
      %203 = dma.done [#allocation3], 128
    $region29: #{tpu_custom_call.1} parent=1 // pred_fallthru
      _
    %204 = vsyncpa [#allocation3], 1

</llo_original>
